<compile_context>
chip_gen: v5e
topology: v5e:2x2
jax: 0.10.0
libtpu: 0.0.40
codegen_flags: <defaults>
</compile_context>

<pallas_src>
import functools

import jax
import jax.numpy as jnp
import numpy as np
from jax.experimental import pallas as pl
from jax.experimental.pallas import tpu as pltpu


def _dice_partial_kernel(pred_ref, tgt_ref, inter_ref, sums_ref, count_ref, *, masked):
    """Accumulate per-class partial sums over one (C, TN) spatial tile.

    pred_ref:  (C, TN)   f32 logits tile (batch 0)
    tgt_ref:   (1, TN)   i32 labels tile (padded positions carry -1)
    inter_ref: (1, C, 1) f32 running sum of  s[c, x] * onehot[c, x]
    sums_ref:  (1, C, 1) f32 running sum of  s[c, x] (valid x only)
    count_ref: (1, C, 1) f32 running sum of  onehot[c, x]
    """
    i = pl.program_id(1)  # inner ("arbitrary") reduction axis

    @pl.when(i == 0)
    def _init():
        inter_ref[...] = jnp.zeros_like(inter_ref)
        sums_ref[...] = jnp.zeros_like(sums_ref)
        count_ref[...] = jnp.zeros_like(count_ref)

    logits = pred_ref[...]                                      # (C, TN)
    tgt = tgt_ref[...]                                          # (1, TN)

    # Softmax over the class (sublane) axis; reciprocal-multiply form.
    m = jnp.max(logits, axis=0, keepdims=True)                  # (1, TN)
    e = jnp.exp(logits - m)                                     # (C, TN)
    inv = pl.reciprocal(jnp.sum(e, axis=0, keepdims=True))      # exact: keep 1e-6 tolerance
    probs = e * inv

    # Reference quirk: sigmoid is applied on top of the softmax probabilities.
    s = jax.nn.sigmoid(probs)                                   # (C, TN)

    C, TN = s.shape
    class_ids = jax.lax.broadcasted_iota(jnp.int32, (C, TN), 0)
    onehot = (class_ids == tgt).astype(jnp.float32)             # (C, TN) lane-dense one-hot

    if masked:
        # Padded positions carry tgt == -1: the one-hot is already zero there,
        # only the plain probability sum needs an explicit validity mask.
        s_for_sum = s * (tgt >= 0).astype(jnp.float32)
    else:
        s_for_sum = s

    inter_ref[...] += jnp.sum(s * onehot, axis=-1, keepdims=True)[None]
    sums_ref[...] += jnp.sum(s_for_sum, axis=-1, keepdims=True)[None]
    count_ref[...] += jnp.sum(onehot, axis=-1, keepdims=True)[None]


def dice_loss_pallas(pred, target, num_classes, ignore_idx=None, *,
                     tile_lanes=64 * 1024, num_splits=2):
    """pred: (B, C, H, W) float32 logits; target: (B, H, W) int labels."""
    B, C, H, W = pred.shape
    assert C == num_classes
    N = H * W

    pred0 = pred[0].reshape(C, N).astype(jnp.float32)
    tgt0 = target[0].reshape(1, N).astype(jnp.int32)

    def _round_up(x, m):
        return ((x + m - 1) // m) * m

    # Tile size: multiple of 128 lanes, capped so a double-buffered (C, TN)
    # f32 tile stays well under every chip's default scoped-VMEM limit.
    TN = min(tile_lanes, _round_up(N, 128))
    n_tiles = pl.cdiv(N, TN)
    splits = num_splits if n_tiles >= num_splits else 1
    tiles_per_split = pl.cdiv(n_tiles, splits)
    N_pad = splits * tiles_per_split * TN
    pad = N_pad - N
    masked = pad > 0
    if pad:
        pred0 = jnp.pad(pred0, ((0, 0), (0, pad)))
        tgt0 = jnp.pad(tgt0, ((0, 0), (0, pad)), constant_values=-1)

    kernel = functools.partial(_dice_partial_kernel, masked=masked)

    part_shape = jax.ShapeDtypeStruct((splits, C, 1), jnp.float32)
    part_spec = pl.BlockSpec((1, C, 1), lambda p, i: (p, 0, 0))

    inter_p, sums_p, count_p = pl.pallas_call(
        kernel,
        out_shape=(part_shape, part_shape, part_shape),
        grid=(splits, tiles_per_split),
        in_specs=[
            pl.BlockSpec((C, TN), lambda p, i: (0, p * tiles_per_split + i)),
            pl.BlockSpec((1, TN), lambda p, i: (0, p * tiles_per_split + i)),
        ],
        out_specs=(part_spec, part_spec, part_spec),
        compiler_params=pltpu.CompilerParams(
            dimension_semantics=("parallel", "arbitrary"),
        ),
    )(pred0, tgt0)

    # Tiny epilogue in the wrapper: combine per-split partials, apply eps
    # exactly once after the full spatial accumulation.
    eps = jnp.float32(1e-6)
    inter = jnp.sum(inter_p, axis=(0, 2))                       # (C,)
    sum_s = jnp.sum(sums_p, axis=(0, 2))                        # (C,)
    count = jnp.sum(count_p, axis=(0, 2))                       # (C,)
    dice = (2.0 * inter + eps) / (sum_s + count + eps)
    dice = dice / jnp.float32(B)                                # ref divides by batch size
    if ignore_idx is not None:
        keep = jnp.arange(num_classes) != ignore_idx
        dice = jnp.where(keep, dice, 0.0)
        n_cls = num_classes - 1
    else:
        n_cls = num_classes
    return 1.0 - jnp.sum(dice) / jnp.float32(n_cls)


def dice_loss_reference(pred, target, num_classes, ignore_idx=None):
    """Pure-JAX replica of the (quirky) PyTorch reference, for verification."""
    eps = 1e-6
    B = pred.shape[0]
    probs = jax.nn.softmax(pred.astype(jnp.float32), axis=1)
    dices = []
    for c in range(num_classes):
        if ignore_idx is not None and c == ignore_idx:
            continue
        p = jax.nn.sigmoid(probs[:, c, :, :])            # sigmoid-of-softmax quirk
        t = jnp.where(target == c, 1, 0).astype(jnp.float32)
        p0 = p[0].reshape(-1)                            # only batch 0 is used
        t0 = t[0].reshape(-1)
        inter = jnp.sum(p0 * t0)
        sum_sets = jnp.sum(p0) + jnp.sum(t0)
        dices.append(((2.0 * inter + eps) / (sum_sets + eps)) / B)
    return 1.0 - sum(dices) / len(dices)


if __name__ == "__main__":
    NUM_CLASSES = 4
    B, H, W = 2, 16, 16

    key = jax.random.PRNGKey(0)
    k_pred, k_tgt = jax.random.split(key)
    pred = jax.random.normal(k_pred, (B, NUM_CLASSES, H, W), dtype=jnp.float32)
    target = jax.random.randint(k_tgt, (B, H, W), 0, NUM_CLASSES, dtype=jnp.int32)

    # Main case: single tile, no padding.
    loss = jax.block_until_ready(dice_loss_pallas(pred, target, NUM_CLASSES))
    loss_ref = dice_loss_reference(pred, target, NUM_CLASSES)
    np.testing.assert_allclose(np.asarray(loss), np.asarray(loss_ref), rtol=1e-5, atol=1e-6)

    # ignore_idx path.
    loss_i = jax.block_until_ready(dice_loss_pallas(pred, target, NUM_CLASSES, ignore_idx=1))
    loss_i_ref = dice_loss_reference(pred, target, NUM_CLASSES, ignore_idx=1)
    np.testing.assert_allclose(np.asarray(loss_i), np.asarray(loss_i_ref), rtol=1e-5, atol=1e-6)

    # Multi-tile + 2-way split path (forces the tiled reduction, no padding).
    loss_t = jax.block_until_ready(
        dice_loss_pallas(pred, target, NUM_CLASSES, tile_lanes=128))
    np.testing.assert_allclose(np.asarray(loss_t), np.asarray(loss_ref), rtol=1e-5, atol=1e-6)

    # Non-128-aligned spatial size: exercises sentinel padding + masking.
    H2, W2 = 20, 20
    pred2 = jax.random.normal(k_pred, (B, NUM_CLASSES, H2, W2), dtype=jnp.float32)
    target2 = jax.random.randint(k_tgt, (B, H2, W2), 0, NUM_CLASSES, dtype=jnp.int32)
    loss_p = jax.block_until_ready(
        dice_loss_pallas(pred2, target2, NUM_CLASSES, tile_lanes=128))
    loss_p_ref = dice_loss_reference(pred2, target2, NUM_CLASSES)
    np.testing.assert_allclose(np.asarray(loss_p), np.asarray(loss_p_ref), rtol=1e-5, atol=1e-6)

    # TODO(synk): weighted=True path depends on `calc_weights`, which is not
    # defined in the reference module, so it is not implemented here.

    print("KERNEL_OK")
</pallas_src>

<mosaic_0001>
module attributes {stable_mosaic.version = 11 : i64} {
  func.func @_dice_partial_kernel(%arg0: i32, %arg1: i32, %arg2: memref<4x256xf32, #tpu.memory_space<vmem>>, %arg3: memref<1x256xi32, #tpu.memory_space<vmem>>, %arg4: memref<1x4x1xf32, #tpu.memory_space<vmem>>, %arg5: memref<1x4x1xf32, #tpu.memory_space<vmem>>, %arg6: memref<1x4x1xf32, #tpu.memory_space<vmem>>) attributes {dimension_semantics = [#tpu.dimension_semantics<parallel>, #tpu.dimension_semantics<arbitrary>], iteration_bounds = array<i64: 1, 1>, scalar_prefetch = 0 : i64, scratch_operands = 0 : i64, tpu.core_type = #tpu.core_type<tc>, window_params = [{transform_indices = @transform_0, window_bounds = array<i64: 4, 256>}, {transform_indices = @transform_1, window_bounds = array<i64: 1, 256>}, {transform_indices = @transform_2, window_bounds = array<i64: 1, 4, 1>}, {transform_indices = @transform_3, window_bounds = array<i64: 1, 4, 1>}, {transform_indices = @transform_4, window_bounds = array<i64: 1, 4, 1>}]} {
    %c0_i32 = arith.constant 0 : i32
    %0 = arith.cmpi eq, %arg1, %c0_i32 : i32
    %1 = arith.extui %0 : i1 to i32
    %c0_i32_0 = arith.constant 0 : i32
    %2 = arith.cmpi ne, %1, %c0_i32_0 : i32
    scf.if %2 {
      %cst_27 = arith.constant 0.000000e+00 : f32
      %44 = vector.broadcast %cst_27 : f32 to vector<1x4x1xf32>
      %c0_28 = arith.constant 0 : index
      %c0_29 = arith.constant 0 : index
      %c0_30 = arith.constant 0 : index
      %45 = vector.load %arg4[%c0_28, %c0_29, %c0_30] : memref<1x4x1xf32, #tpu.memory_space<vmem>>, vector<1x4x1xf32>
      tpu.vector_store %arg4[%c0_28, %c0_29, %c0_30], %44 {strides = array<i32>} : memref<1x4x1xf32, #tpu.memory_space<vmem>>, vector<1x4x1xf32>,
      %cst_31 = arith.constant 0.000000e+00 : f32
      %46 = vector.broadcast %cst_31 : f32 to vector<1x4x1xf32>
      %c0_32 = arith.constant 0 : index
      %c0_33 = arith.constant 0 : index
      %c0_34 = arith.constant 0 : index
      %47 = vector.load %arg5[%c0_32, %c0_33, %c0_34] : memref<1x4x1xf32, #tpu.memory_space<vmem>>, vector<1x4x1xf32>
      tpu.vector_store %arg5[%c0_32, %c0_33, %c0_34], %46 {strides = array<i32>} : memref<1x4x1xf32, #tpu.memory_space<vmem>>, vector<1x4x1xf32>,
      %cst_35 = arith.constant 0.000000e+00 : f32
      %48 = vector.broadcast %cst_35 : f32 to vector<1x4x1xf32>
      %c0_36 = arith.constant 0 : index
      %c0_37 = arith.constant 0 : index
      %c0_38 = arith.constant 0 : index
      %49 = vector.load %arg6[%c0_36, %c0_37, %c0_38] : memref<1x4x1xf32, #tpu.memory_space<vmem>>, vector<1x4x1xf32>
      tpu.vector_store %arg6[%c0_36, %c0_37, %c0_38], %48 {strides = array<i32>} : memref<1x4x1xf32, #tpu.memory_space<vmem>>, vector<1x4x1xf32>,
    } else {
    }
    %c0 = arith.constant 0 : index
    %c0_1 = arith.constant 0 : index
    %3 = vector.load %arg2[%c0, %c0_1] : memref<4x256xf32, #tpu.memory_space<vmem>>, vector<4x256xf32>
    %c0_2 = arith.constant 0 : index
    %c0_3 = arith.constant 0 : index
    %4 = vector.load %arg3[%c0_2, %c0_3] : memref<1x256xi32, #tpu.memory_space<vmem>>, vector<1x256xi32>
    %cst = arith.constant dense<0xFF800000> : vector<256xf32>
    %5 = vector.multi_reduction <maximumf>, %3, %cst [0] : vector<4x256xf32> to vector<256xf32>
    %6 = vector.shape_cast %5 : vector<256xf32> to vector<1x256xf32>
    %7 = vector.broadcast %6 : vector<1x256xf32> to vector<4x256xf32>
    %8 = arith.subf %3, %7 : vector<4x256xf32>
    %9 = math.exp %8 : vector<4x256xf32>
    %cst_4 = arith.constant dense<0.000000e+00> : vector<256xf32>
    %10 = vector.multi_reduction <add>, %9, %cst_4 [0] : vector<4x256xf32> to vector<256xf32>
    %11 = vector.shape_cast %10 : vector<256xf32> to vector<1x256xf32>
    %12 = tpu.reciprocal %11 : vector<1x256xf32> -> vector<1x256xf32>
    %13 = vector.broadcast %12 : vector<1x256xf32> to vector<4x256xf32>
    %14 = arith.mulf %9, %13 : vector<4x256xf32>
    %15 = arith.negf %14 : vector<4x256xf32>
    %16 = math.exp %15 : vector<4x256xf32>
    %cst_5 = arith.constant 1.000000e+00 : f32
    %17 = vector.broadcast %cst_5 : f32 to vector<4x256xf32>
    %18 = arith.addf %17, %16 : vector<4x256xf32>
    %19 = arith.divf %17, %18 : vector<4x256xf32>
    %20 = tpu.iota {dimensions = array<i32: 0>} : vector<4x256xi32>
    %21 = vector.broadcast %4 : vector<1x256xi32> to vector<4x256xi32>
    %22 = arith.cmpi eq, %20, %21 : vector<4x256xi32>
    %23 = arith.extui %22 : vector<4x256xi1> to vector<4x256xi32>
    %24 = arith.sitofp %23 : vector<4x256xi32> to vector<4x256xf32>
    %c0_6 = arith.constant 0 : index
    %c0_7 = arith.constant 0 : index
    %c0_8 = arith.constant 0 : index
    %25 = vector.load %arg4[%c0_6, %c0_7, %c0_8] : memref<1x4x1xf32, #tpu.memory_space<vmem>>, vector<1x4x1xf32>
    %26 = arith.mulf %19, %24 : vector<4x256xf32>
    %cst_9 = arith.constant dense<0.000000e+00> : vector<4xf32>
    %27 = vector.multi_reduction <add>, %26, %cst_9 [1] : vector<4x256xf32> to vector<4xf32>
    %28 = vector.shape_cast %27 : vector<4xf32> to vector<4x1xf32>
    %29 = vector.shape_cast %28 : vector<4x1xf32> to vector<1x4x1xf32>
    %30 = arith.addf %25, %29 : vector<1x4x1xf32>
    %c0_10 = arith.constant 0 : index
    %c0_11 = arith.constant 0 : index
    %c0_12 = arith.constant 0 : index
    %31 = vector.load %arg4[%c0_10, %c0_11, %c0_12] : memref<1x4x1xf32, #tpu.memory_space<vmem>>, vector<1x4x1xf32>
    tpu.vector_store %arg4[%c0_10, %c0_11, %c0_12], %30 {strides = array<i32>} : memref<1x4x1xf32, #tpu.memory_space<vmem>>, vector<1x4x1xf32>,
    %c0_13 = arith.constant 0 : index
    %c0_14 = arith.constant 0 : index
    %c0_15 = arith.constant 0 : index
    %32 = vector.load %arg5[%c0_13, %c0_14, %c0_15] : memref<1x4x1xf32, #tpu.memory_space<vmem>>, vector<1x4x1xf32>
    %cst_16 = arith.constant dense<0.000000e+00> : vector<4xf32>
    %33 = vector.multi_reduction <add>, %19, %cst_16 [1] : vector<4x256xf32> to vector<4xf32>
    %34 = vector.shape_cast %33 : vector<4xf32> to vector<4x1xf32>
    %35 = vector.shape_cast %34 : vector<4x1xf32> to vector<1x4x1xf32>
    %36 = arith.addf %32, %35 : vector<1x4x1xf32>
    %c0_17 = arith.constant 0 : index
    %c0_18 = arith.constant 0 : index
    %c0_19 = arith.constant 0 : index
    %37 = vector.load %arg5[%c0_17, %c0_18, %c0_19] : memref<1x4x1xf32, #tpu.memory_space<vmem>>, vector<1x4x1xf32>
    tpu.vector_store %arg5[%c0_17, %c0_18, %c0_19], %36 {strides = array<i32>} : memref<1x4x1xf32, #tpu.memory_space<vmem>>, vector<1x4x1xf32>,
    %c0_20 = arith.constant 0 : index
    %c0_21 = arith.constant 0 : index
    %c0_22 = arith.constant 0 : index
    %38 = vector.load %arg6[%c0_20, %c0_21, %c0_22] : memref<1x4x1xf32, #tpu.memory_space<vmem>>, vector<1x4x1xf32>
    %cst_23 = arith.constant dense<0.000000e+00> : vector<4xf32>
    %39 = vector.multi_reduction <add>, %24, %cst_23 [1] : vector<4x256xf32> to vector<4xf32>
    %40 = vector.shape_cast %39 : vector<4xf32> to vector<4x1xf32>
    %41 = vector.shape_cast %40 : vector<4x1xf32> to vector<1x4x1xf32>
    %42 = arith.addf %38, %41 : vector<1x4x1xf32>
    %c0_24 = arith.constant 0 : index
    %c0_25 = arith.constant 0 : index
    %c0_26 = arith.constant 0 : index
    %43 = vector.load %arg6[%c0_24, %c0_25, %c0_26] : memref<1x4x1xf32, #tpu.memory_space<vmem>>, vector<1x4x1xf32>
    tpu.vector_store %arg6[%c0_24, %c0_25, %c0_26], %42 {strides = array<i32>} : memref<1x4x1xf32, #tpu.memory_space<vmem>>, vector<1x4x1xf32>,
    return
  }
  func.func @transform_0(%arg0: i32, %arg1: i32) -> (i32, i32) {
    %c1_i32 = arith.constant 1 : i32
    %0 = arith.muli %arg0, %c1_i32 : i32
    %1 = arith.addi %0, %arg1 : i32
    %c0_i32 = arith.constant 0 : i32
    %c0_i32_0 = arith.constant 0 : i32
    return %c0_i32, %1 : i32, i32
  }
  func.func @transform_1(%arg0: i32, %arg1: i32) -> (i32, i32) {
    %c1_i32 = arith.constant 1 : i32
    %0 = arith.muli %arg0, %c1_i32 : i32
    %1 = arith.addi %0, %arg1 : i32
    %c0_i32 = arith.constant 0 : i32
    %c0_i32_0 = arith.constant 0 : i32
    return %c0_i32, %1 : i32, i32
  }
  func.func @transform_2(%arg0: i32, %arg1: i32) -> (i32, i32, i32) {
    %c0_i32 = arith.constant 0 : i32
    %c0_i32_0 = arith.constant 0 : i32
    %c0_i32_1 = arith.constant 0 : i32
    return %arg0, %c0_i32, %c0_i32_0 : i32, i32, i32
  }
  func.func @transform_3(%arg0: i32, %arg1: i32) -> (i32, i32, i32) {
    %c0_i32 = arith.constant 0 : i32
    %c0_i32_0 = arith.constant 0 : i32
    %c0_i32_1 = arith.constant 0 : i32
    return %arg0, %c0_i32, %c0_i32_0 : i32, i32, i32
  }
  func.func @transform_4(%arg0: i32, %arg1: i32) -> (i32, i32, i32) {
    %c0_i32 = arith.constant 0 : i32
    %c0_i32_0 = arith.constant 0 : i32
    %c0_i32_1 = arith.constant 0 : i32
    return %arg0, %c0_i32, %c0_i32_0 : i32, i32, i32
  }
}

</mosaic_0001>

<llo_original>
// kernel: tpu_custom_call.1
$region0: #{tpu_custom_call.1}
  #allocation0 [shape = 'u32[]', space=smem, size = 0x4, offset = 0x4, fixed_abs, tag = 'smem constant byte address 0x4 - core index']
  #allocation1 [shape = 'u32[72,128]{1,0:T(1,128)}', space=vmem, size = 0x9000, scoped, tag = 'internal scratch']
  %s0 = inlined_call_operand.hbm [shape: f32[4,256], index: 0, kind: input, shape index: {}]
  %s1 = inlined_call_operand.hbm [shape: s32[1,256], index: 1, kind: input, shape index: {}]
  %s2 = inlined_call_operand.vmem [shape: f32[1,4,1], index: 2, kind: output, shape index: {0}]
  %s3 = inlined_call_operand.vmem [shape: f32[1,4,1], index: 3, kind: output, shape index: {1}]
  %s4 = inlined_call_operand.vmem [shape: f32[1,4,1], index: 4, kind: output, shape index: {2}]
  %5 = xla_tuple %s2, %s3, %s4
  %s6 = sld [smem:[#allocation0]]
  $region46: #{tpu_custom_call.1} parent=0
    _
  %s8 = ssub.s32 1, %s6
  %s9 = scalar_select 0, %s8, %s6
  $region1: #{tpu_custom_call.1} parent=0
    #allocation2 [shape = 'u8[4096]{0}', space=vmem, size = 0x1000, scoped, tag = 'input window, operand 0, single buffered']
    #allocation3 [shape = 's32[1]{0}', space=sflag, size = 0x4, scoped, tag = 'scoped memory for tpu_custom_call.1']
    #allocation4 [shape = 'u8[1024]{0}', space=vmem, size = 0x400, scoped, tag = 'input window, operand 1, single buffered']
    #allocation5 [shape = 's32[1]{0}', space=sflag, size = 0x4, scoped, tag = 'scoped memory for tpu_custom_call.1']
    %10 = vsyncpa [#allocation3], 0
    %11 = vsyncpa [#allocation5], 0
    // Predicated region
    $region2: #{tpu_custom_call.1} parent=1 // pred_check
      _
    $region3: #{tpu_custom_call.1} parent=1 // pred_check_branch
      %13 = sbr.rel (0) target = $region5
    $region4: #{tpu_custom_call.1} parent=1 // pred_region
      %s14 = sadd.s32 0, 0
      %s15 = smul.u32 2, %s14
      %17 = vsyncadd [#allocation3], 0
      %s18 = smul.addr %s15, 4
      %s19 = scalar_lea.hbm %s0, %s18
      %s21 = sshll.u32 %s19, 4
      %s22 = int_to_ptr.hbm [resolvable:$true] %s21
      %s23 = sshll.u32 [#allocation2], 4
      %s24 = int_to_ptr.vmem [resolvable:$true] %s23
      %26 = dma.hbm_to_vmem [thread:$0]  %s22, 128, %s24, [#allocation3]
    $region5: #{tpu_custom_call.1} parent=1 // pred_fallthru
      _
    // Predicated region
    $region6: #{tpu_custom_call.1} parent=1 // pred_check
      _
    $region7: #{tpu_custom_call.1} parent=1 // pred_check_branch
      %28 = sbr.rel (0) target = $region9
    $region8: #{tpu_custom_call.1} parent=1 // pred_region
      %s29 = sadd.s32 0, 0
      %s30 = smul.u32 2, %s29
      %32 = vsyncadd [#allocation5], 0
      %s33 = scalar_lea.hbm %s1, %s30
      %s35 = sshll.u32 %s33, 4
      %s36 = int_to_ptr.hbm [resolvable:$true] %s35
      %s37 = sshll.u32 [#allocation4], 4
      %s38 = int_to_ptr.vmem [resolvable:$true] %s37
      %40 = dma.hbm_to_vmem [thread:$0]  %s36, 32, %s38, [#allocation5]
    $region9: #{tpu_custom_call.1} parent=1 // pred_fallthru
      _
    // Predicated region
    $region10: #{tpu_custom_call.1} parent=1 // pred_check
      _
    $region11: #{tpu_custom_call.1} parent=1 // pred_check_branch
      %42 = sbr.rel (0) target = $region13
    $region12: #{tpu_custom_call.1} parent=1 // pred_region
      %44 = dma.done [#allocation3], 128
    $region13: #{tpu_custom_call.1} parent=1 // pred_fallthru
      _
    // Predicated region
    $region14: #{tpu_custom_call.1} parent=1 // pred_check
      _
    $region15: #{tpu_custom_call.1} parent=1 // pred_check_branch
      %46 = sbr.rel (0) target = $region17
    $region16: #{tpu_custom_call.1} parent=1 // pred_region
      %48 = dma.done [#allocation5], 32
    $region17: #{tpu_custom_call.1} parent=1 // pred_fallthru
      _
    %s49 = sadd.s32 0, 0
    %s50 = smul.u32 2, %s49
    %s51 = sadd.s32 0, 0
    %s52 = smul.u32 2, %s51
    %p53 = scmp.eq.s32.totalorder 0, 0
    // Predicated region
    $region18: #{tpu_custom_call.1} parent=1 // pred_check
      %p54 = pneg %p53
    $region19: #{tpu_custom_call.1} parent=1 // pred_check_branch
      %56 = sbr.rel (%p54) target = $region21
    $region20: #{tpu_custom_call.1} parent=1 // pred_region
      %vm57 = vcmask 3072
      %58 = vst.msk [vmem:[%s2] sm:$0xf] %vm57, 0.0
      %59 = vst.msk [vmem:[%s3] sm:$0xf] %vm57, 0.0
      %60 = vst.msk [vmem:[%s4] sm:$0xf] %vm57, 0.0
    $region21: #{tpu_custom_call.1} parent=1 // pred_fallthru
      _
    %v61 = vld [vmem:[#allocation2] sm:$0xff]
    %v62 = vld [vmem:[#allocation4] sm:$0x3]
    %64 = vst [vmem:[#allocation1] ss:$2 sm:$0xff] %v61
    %v65 = vld.sshfl [vmem:[#allocation1] sm:$0xff pattern:$0x75316420]
    %v66 = vld.sshfl [vmem:[#allocation1 + $0x8] sm:$0xff pattern:$0x75316420]
    %vm69 = vcmask 1043456
    %v70 = vsel %vm69, %v65, -inf
    %v71 = vrot.slane %v70, 4
    %v72 = vmax.f32 %v70, %v71
    %v73 = vrot.slane %v72, 2
    %v74 = vmax.f32 %v72, %v73
    %v75 = vrot.slane %v74, 1
    %v76 = vmax.f32 %v74, %v75
    %v77 = vsel %vm69, %v66, -inf
    %v78 = vrot.slane %v77, 4
    %v79 = vmax.f32 %v77, %v78
    %v80 = vrot.slane %v79, 2
    %v81 = vmax.f32 %v79, %v80
    %v82 = vrot.slane %v81, 1
    %v83 = vmax.f32 %v81, %v82
    %v86 = vrot.slane %v83, 4
    %v87 = vsel %vm69, %v76, %v86
    %v89 = vsub.f32 %v61, %v87
    %v90 = vmul.f32 %v89, 1.442695
    %v91 = vpow.pop %v90
    %93 = vst [vmem:[#allocation1] ss:$2 sm:$0xff] %v91
    %v94 = vld.sshfl [vmem:[#allocation1] sm:$0xff pattern:$0x75316420]
    %v95 = vld.sshfl [vmem:[#allocation1 + $0x8] sm:$0xff pattern:$0x75316420]
    %v98 = vsel %vm69, %v94, 0.0
    %v99 = vrot.slane %v98, 4
    %v100 = vadd.f32 %v98, %v99
    %v101 = vrot.slane %v100, 2
    %v102 = vadd.f32 %v100, %v101
    %v103 = vrot.slane %v102, 1
    %v104 = vadd.f32 %v102, %v103
    %v105 = vsel %vm69, %v95, 0.0
    %v106 = vrot.slane %v105, 4
    %v107 = vadd.f32 %v105, %v106
    %v108 = vrot.slane %v107, 2
    %v109 = vadd.f32 %v107, %v108
    %v110 = vrot.slane %v109, 1
    %v111 = vadd.f32 %v109, %v110
    %v112 = vrcp.pop %v104
    %v113 = vmul.f32 %v104, %v112
    %v114 = vsub.f32 1.0, %v113
    %v115 = vmul.f32 %v112, %v114
    %v116 = vadd.f32 %v112, %v115
    %vm117 = vweird.f32 %v104
    %vm118 = vweird.f32 %v112
    %vm119 = vmor %vm117, %vm118
    %v120 = vsel %vm119, %v112, %v116
    %v121 = vand.u32 2147483647, %v104
    %vm122 = vcmp.eq.f32.partialorder %v121, 8.507059e+37
    %v123 = vand.u32 %v104, 2147483648
    %v124 = vor.u32 1.1754944e-38, %v123
    %v125 = vsel %vm122, %v124, %v120
    %v126 = vrcp.pop %v111
    %v127 = vmul.f32 %v111, %v126
    %v128 = vsub.f32 1.0, %v127
    %v129 = vmul.f32 %v126, %v128
    %v130 = vadd.f32 %v126, %v129
    %vm131 = vweird.f32 %v111
    %vm132 = vweird.f32 %v126
    %vm133 = vmor %vm131, %vm132
    %v134 = vsel %vm133, %v126, %v130
    %v135 = vand.u32 2147483647, %v111
    %vm136 = vcmp.eq.f32.partialorder %v135, 8.507059e+37
    %v137 = vand.u32 %v111, 2147483648
    %v138 = vor.u32 1.1754944e-38, %v137
    %v139 = vsel %vm136, %v138, %v134
    %v142 = vrot.slane %v139, 4
    %v143 = vsel %vm69, %v125, %v142
    %v145 = vmul.f32 %v91, %v143
    %v146 = vxor.u32 %v145, 2147483648
    %v147 = vmul.f32 %v146, 1.442695
    %v148 = vpow.pop %v147
    %v149 = vadd.f32 %v148, 1.0
    %v150 = vrcp.pop %v149
    %v151 = vmul.f32 %v149, %v150
    %v152 = vsub.f32 1.0, %v151
    %v153 = vmul.f32 %v150, %v152
    %v154 = vadd.f32 %v150, %v153
    %vm155 = vweird.f32 %v149
    %vm156 = vweird.f32 %v150
    %vm157 = vmor %vm155, %vm156
    %v158 = vsel %vm157, %v150, %v154
    %v159 = vand.u32 2147483647, %v149
    %vm160 = vcmp.eq.f32.partialorder %v159, 8.507059e+37
    %v161 = vand.u32 %v149, 2147483648
    %v162 = vor.u32 1.1754944e-38, %v161
    %v163 = vsel %vm160, %v162, %v158
    %v164 = vmul.f32 1.0, %v163
    %v165 = vlaneseq
    %v166 = vshrl.u32 %v165, 7
    %v167 = vperm.slane %v62, 0
    %v168 = vperm.slane %v62, 1
    %vm169 = vcmp.eq.s32.totalorder %v166, %v167
    %vm170 = vcmp.eq.s32.totalorder %v166, %v168
    %v171 = vsel %vm169, 1, 0
    %v172 = vsel %vm170, 1, 0
    %v173 = vcvt.s32.f32 %v171
    %v174 = vcvt.s32.f32 %v172
    %v175 = vld [vmem:[%s2] sm:$0xf]
    %v178 = vrot.slane %v174, 4
    %v179 = vsel %vm69, %v173, %v178
    %v181 = vmul.f32 %v164, %v179
    %183 = vst [vmem:[#allocation1] ss:$2 sm:$0xff] %v181
    %v184 = vld.sshfl [vmem:[#allocation1] sm:$0xff pattern:$0x75316420]
    %v185 = vld.sshfl [vmem:[#allocation1 + $0x8] sm:$0xff pattern:$0x75316420]
    %v188 = vsel %vm69, %v184, 0.0
    %v189 = vsel %vm69, %v185, 0.0
    %v190 = vadd.f32 %v188, %v189
    %191 = vadd.xlane.f32.xlu0 %v190
    %v192 = vpop.xlane.xlu0 %191
    %v193 = vadd.f32 %v175, %v192
    %vm194 = vcmask 3072
    %195 = vst.msk [vmem:[%s2] sm:$0xf] %vm194, %v193
    %v196 = vld [vmem:[%s3] sm:$0xf]
    %198 = vst [vmem:[#allocation1] ss:$2 sm:$0xff] %v164
    %v199 = vld.sshfl [vmem:[#allocation1] sm:$0xff pattern:$0x75316420]
    %v200 = vld.sshfl [vmem:[#allocation1 + $0x8] sm:$0xff pattern:$0x75316420]
    %v203 = vsel %vm69, %v199, 0.0
    %v204 = vsel %vm69, %v200, 0.0
    %v205 = vadd.f32 %v203, %v204
    %206 = vadd.xlane.f32.xlu0 %v205
    %v207 = vpop.xlane.xlu0 %206
    %v208 = vadd.f32 %v196, %v207
    %209 = vst.msk [vmem:[%s3] sm:$0xf] %vm194, %v208
    %v210 = vld [vmem:[%s4] sm:$0xf]
    %v211 = vsel %vm69, %v173, 0.0
    %v212 = vsel %vm69, %v174, 0.0
    %v213 = vadd.f32 %v211, %v212
    %214 = vadd.xlane.f32.xlu0 %v213
    %v215 = vpop.xlane.xlu0 %214
    %v216 = vadd.f32 %v210, %v215
    %217 = vst.msk [vmem:[%s4] sm:$0xf] %vm194, %v216
    // Predicated region
    $region22: #{tpu_custom_call.1} parent=1 // pred_check
      _
    $region23: #{tpu_custom_call.1} parent=1 // pred_check_branch
      %219 = sbr.rel (0) target = $region25
    $region24: #{tpu_custom_call.1} parent=1 // pred_region
      _
    $region25: #{tpu_custom_call.1} parent=1 // pred_fallthru
      _
    // Predicated region
    $region26: #{tpu_custom_call.1} parent=1 // pred_check
      _
    $region27: #{tpu_custom_call.1} parent=1 // pred_check_branch
      %221 = sbr.rel (0) target = $region29
    $region28: #{tpu_custom_call.1} parent=1 // pred_region
      _
    $region29: #{tpu_custom_call.1} parent=1 // pred_fallthru
      _
    // Predicated region
    $region30: #{tpu_custom_call.1} parent=1 // pred_check
      _
    $region31: #{tpu_custom_call.1} parent=1 // pred_check_branch
      %223 = sbr.rel (0) target = $region33
    $region32: #{tpu_custom_call.1} parent=1 // pred_region
      _
    $region33: #{tpu_custom_call.1} parent=1 // pred_fallthru
      _
    // Predicated region
    $region34: #{tpu_custom_call.1} parent=1 // pred_check
      _
    $region35: #{tpu_custom_call.1} parent=1 // pred_check_branch
      %225 = sbr.rel (0) target = $region37
    $region36: #{tpu_custom_call.1} parent=1 // pred_region
      _
    $region37: #{tpu_custom_call.1} parent=1 // pred_fallthru
      _
    // Predicated region
    $region38: #{tpu_custom_call.1} parent=1 // pred_check
      _
    $region39: #{tpu_custom_call.1} parent=1 // pred_check_branch
      %227 = sbr.rel (0) target = $region41
    $region40: #{tpu_custom_call.1} parent=1 // pred_region
      _
    $region41: #{tpu_custom_call.1} parent=1 // pred_fallthru
      _
    // Predicated region
    $region42: #{tpu_custom_call.1} parent=1 // pred_check
      _
    $region43: #{tpu_custom_call.1} parent=1 // pred_check_branch
      %229 = sbr.rel (0) target = $region45
    $region44: #{tpu_custom_call.1} parent=1 // pred_region
      _
    $region45: #{tpu_custom_call.1} parent=1 // pred_fallthru
      _
    %230 = vsyncpa [#allocation3], 1
    %231 = vsyncpa [#allocation5], 1

</llo_original>
